<compile_context>
chip_gen: v7x
topology: tpu7x:2x2x1
jax: 0.10.0
libtpu: 0.0.40
codegen_flags: <defaults>
</compile_context>

<pallas_src>
import functools

import jax
import jax.numpy as jnp
from jax.experimental import pallas as pl
from jax.experimental.pallas import tpu as pltpu


# ----------------------------- kernels ------------------------------------ #

def _ssb_kernel(w_ref, b_ref, x_ref, o_ref):
    x = x_ref[...].astype(jnp.float32)
    o_ref[...] = (x * w_ref[0] + b_ref[0]).astype(o_ref.dtype)


def _scale_only_kernel(w_ref, x_ref, o_ref):
    x = x_ref[...].astype(jnp.float32)
    o_ref[...] = (x * w_ref[0]).astype(o_ref.dtype)


def _bias_only_kernel(b_ref, x_ref, o_ref):
    x = x_ref[...].astype(jnp.float32)
    o_ref[...] = (x + b_ref[0]).astype(o_ref.dtype)


# --------------------------- hardware sizing ------------------------------- #

_LANE_CHOICES = (2048, 1024, 512, 256, 128)
_SUBLANE_MULT = 32          # legal sublane multiple for f32 / bf16 / int8 tiles
_SPLIT_BYTES = 1 << 20      # split a single-tile slab above ~1 MiB (v7x megacore)

_HW_CACHE = None


def _hw_params():
    """Per-generation (tile_bytes, vmem_limit_bytes)."""
    global _HW_CACHE
    if _HW_CACHE is None:
        # v5e / v6e / unknown: 4 MiB blocks; raising scoped VMEM to 32 MiB is
        # safe (128 MiB physical) and needed on v5e whose default is 16 MiB.
        tile_bytes, vmem_limit = 4 << 20, 32 << 20
        try:
            vmem_cap = pltpu.get_tpu_info().vmem_capacity_bytes
            if vmem_cap <= (64 << 20):
                # v7x: faster HBM -> per-step overhead bites sooner, use 8 MiB
                # blocks; only 64 MiB physical VMEM so cap scoped at 40 MiB.
                tile_bytes, vmem_limit = 8 << 20, 40 << 20
        except Exception:
            pass
        _HW_CACHE = (tile_bytes, vmem_limit)
    return _HW_CACHE


# ------------------------------ internals ---------------------------------- #

def _apply_jax(x, w, b):
    """Plain-JAX path for <128-element tails / sub-vreg tensors."""
    y = x.astype(jnp.float32)
    if w is not None:
        y = y * w[0]
    if b is not None:
        y = y + b[0]
    return y.astype(x.dtype)


def _run_slab(slab, scalars, kernel, n_ops, alias_input):
    """Run the elementwise kernel over a lane-dense (rows, lanes) slab."""
    rows, lanes = slab.shape
    itemsize = jnp.dtype(slab.dtype).itemsize
    tile_bytes, vmem_limit = _hw_params()

    # Dtype-aware block sizing in bytes, rounded to a legal sublane multiple.
    tile_rows = max(_SUBLANE_MULT,
                    (tile_bytes // (lanes * itemsize))
                    // _SUBLANE_MULT * _SUBLANE_MULT)
    if rows <= tile_rows:
        if rows * lanes * itemsize >= _SPLIT_BYTES:
            # Guarantee >=2 grid steps so v7x can use both TensorCores.
            half = -(-rows // 2)
            half = -(-half // _SUBLANE_MULT) * _SUBLANE_MULT
            tile_rows = half if half < rows else rows
        else:
            tile_rows = rows            # full-array block, grid = (1,)
    grid = (pl.cdiv(rows, tile_rows),)  # Pallas masks the partial tail block

    x_spec = pl.BlockSpec((tile_rows, lanes), lambda i: (i, 0))
    o_spec = pl.BlockSpec((tile_rows, lanes), lambda i: (i, 0))
    smem_spec = pl.BlockSpec(memory_space=pltpu.SMEM)

    n = rows * lanes
    cost = pl.CostEstimate(flops=n_ops * n, transcendentals=0,
                           bytes_accessed=2 * n * itemsize)

    extra = {}
    if alias_input:
        # Output reuses the input slab's HBM buffer (callers that donate x).
        extra["input_output_aliases"] = {len(scalars): 0}

    return pl.pallas_call(
        kernel,
        out_shape=jax.ShapeDtypeStruct((rows, lanes), slab.dtype),
        grid=grid,
        in_specs=[smem_spec] * len(scalars) + [x_spec],
        out_specs=o_spec,
        compiler_params=pltpu.CompilerParams(
            dimension_semantics=("parallel",),
            vmem_limit_bytes=vmem_limit),
        cost_estimate=cost,
        **extra,
    )(*scalars, slab)


def _scalar_scale_bias_impl(x, weight, bias, *, alias_input=False):
    orig_shape = x.shape
    n = x.size

    # Parameters stay f32 (32-bit scalar path); cast at the store.
    w = None if weight is None else jnp.asarray(weight, jnp.float32).reshape(1)
    b = None if bias is None else jnp.asarray(bias, jnp.float32).reshape(1)

    if w is not None and b is not None:
        kernel, scalars, n_ops = _ssb_kernel, (w, b), 2
    elif w is not None:
        kernel, scalars, n_ops = _scale_only_kernel, (w,), 1
    else:
        kernel, scalars, n_ops = _bias_only_kernel, (b,), 1

    flat = x.reshape(-1)

    # Lane-dense layout: widest multiple of 128 dividing numel.
    lanes = next((l for l in _LANE_CHOICES if n % l == 0), None)
    if lanes is not None:
        # Common case: zero-copy reshape to a (rows, lanes) slab.
        out = _run_slab(flat.reshape(n // lanes, lanes),
                        scalars, kernel, n_ops, alias_input)
        return out.reshape(orig_shape)

    # Rare case (numel % 128 != 0): no full-array pad/slice copies — run the
    # kernel on the 128-aligned prefix, do the <128-element tail in plain JAX.
    n_main = (n // 128) * 128
    tail = _apply_jax(flat[n_main:], w, b)
    if n_main == 0:
        return tail.reshape(orig_shape)      # tensor smaller than one vreg row
    main = _run_slab(flat[:n_main].reshape(n_main // 128, 128),
                     scalars, kernel, n_ops, False)
    return jnp.concatenate([main.reshape(-1), tail]).reshape(orig_shape)


_ssb_jit = jax.jit(functools.partial(_scalar_scale_bias_impl,
                                     alias_input=False))
_ssb_jit_donate = jax.jit(functools.partial(_scalar_scale_bias_impl,
                                            alias_input=True),
                          donate_argnums=(0,))


# ------------------------------ public API --------------------------------- #

def scalar_scale_bias(x, weight=None, bias=None, *, donate_x=False):
    """y = x * weight + bias with scalar weight/bias (either may be None)."""
    if weight is None and bias is None:
        return x
    fn = _ssb_jit_donate if donate_x else _ssb_jit
    return fn(x, weight, bias)


class ScalarScaleBiasPallas:
    """Mirrors the PyTorch ScalarScaleBias module (constant init)."""

    def __init__(self, scale=True, scale_init=1.0, bias=True, bias_init=0.0):
        self.weight = (jnp.full((1,), scale_init, dtype=jnp.float32)
                       if scale else None)
        self.bias = (jnp.full((1,), bias_init, dtype=jnp.float32)
                     if bias else None)

    def __call__(self, x, donate_x=False):
        return scalar_scale_bias(x, self.weight, self.bias, donate_x=donate_x)


# ------------------------------- test -------------------------------------- #

if __name__ == "__main__":
    key = jax.random.PRNGKey(0)

    module = ScalarScaleBiasPallas(scale=True, scale_init=1.5,
                                   bias=True, bias_init=0.25)

    # f32 path, NCHW input, small shape (numel = 2048 -> single (1, 2048) slab).
    x = jax.random.normal(key, (2, 4, 16, 16), dtype=jnp.float32)
    y = jax.block_until_ready(module(x))
    ref = x * 1.5 + 0.25
    assert y.shape == x.shape and y.dtype == x.dtype
    assert jnp.allclose(y, ref, atol=1e-6, rtol=1e-6)

    # bf16 path (f32 scalars + f32 compute, cast at store).
    xb = x.astype(jnp.bfloat16)
    yb = jax.block_until_ready(module(xb))
    refb = (xb.astype(jnp.float32) * 1.5 + 0.25).astype(jnp.bfloat16)
    assert yb.dtype == jnp.bfloat16
    assert jnp.allclose(yb.astype(jnp.float32), refb.astype(jnp.float32),
                        atol=2e-2, rtol=2e-2)

    # Multi-block path (2 MiB slab -> >=2 grid steps, megacore split branch).
    x_big = jax.random.normal(jax.random.PRNGKey(2), (256, 2048),
                              dtype=jnp.float32)
    y_big = jax.block_until_ready(module(x_big))
    assert jnp.allclose(y_big, x_big * 1.5 + 0.25, atol=1e-6, rtol=1e-6)

    # Donated-input path (input_output_aliases).
    x_don = jnp.array(x_big)                       # private copy to donate
    ref_don = x_big * 1.5 + 0.25
    y_don = jax.block_until_ready(module(x_don, donate_x=True))
    assert jnp.allclose(y_don, ref_don, atol=1e-6, rtol=1e-6)

    # Odd numel, prefix + tail path (1295 = 10*128 + 15).
    x_odd = jax.random.normal(jax.random.PRNGKey(3), (5, 7, 37),
                              dtype=jnp.float32)
    y_odd = jax.block_until_ready(module(x_odd))
    assert jnp.allclose(y_odd, x_odd * 1.5 + 0.25, atol=1e-6, rtol=1e-6)

    # Tiny tensor (< 128 elements) + scale-only / bias-only variants.
    x2 = jax.random.normal(jax.random.PRNGKey(1), (3, 5, 7), dtype=jnp.float32)
    m_scale = ScalarScaleBiasPallas(scale=True, scale_init=2.0, bias=False)
    m_bias = ScalarScaleBiasPallas(scale=False, bias=True, bias_init=-0.5)
    ys = jax.block_until_ready(m_scale(x2))
    yb2 = jax.block_until_ready(m_bias(x2))
    assert jnp.allclose(ys, x2 * 2.0, atol=1e-6, rtol=1e-6)
    assert jnp.allclose(yb2, x2 - 0.5, atol=1e-6, rtol=1e-6)

    print("KERNEL_OK")
</pallas_src>

<mosaic_0001>
module attributes {stable_mosaic.version = 11 : i64} {
  func.func @_ssb_kernel(%arg0: i32, %arg1: memref<1xf32, #tpu.memory_space<smem>>, %arg2: memref<1xf32, #tpu.memory_space<smem>>, %arg3: memref<1x2048xf32, #tpu.memory_space<vmem>>, %arg4: memref<1x2048xf32, #tpu.memory_space<vmem>>) attributes {dimension_semantics = [#tpu.dimension_semantics<parallel>], iteration_bounds = array<i64: 1>, scalar_prefetch = 0 : i64, scratch_operands = 0 : i64, tpu.core_type = #tpu.core_type<tc>, window_params = [{transform_indices = @transform_0, window_bounds = array<i64: 1>}, {transform_indices = @transform_1, window_bounds = array<i64: 1>}, {transform_indices = @transform_2, window_bounds = array<i64: 1, 2048>}, {transform_indices = @transform_3, window_bounds = array<i64: 1, 2048>}]} {
    %c0 = arith.constant 0 : index
    %c0_0 = arith.constant 0 : index
    %0 = vector.load %arg3[%c0, %c0_0] : memref<1x2048xf32, #tpu.memory_space<vmem>>, vector<1x2048xf32>
    %c0_1 = arith.constant 0 : index
    %1 = memref.load %arg1[%c0_1] : memref<1xf32, #tpu.memory_space<smem>>
    %2 = vector.broadcast %1 : f32 to vector<1x2048xf32>
    %3 = arith.mulf %0, %2 : vector<1x2048xf32>
    %c0_2 = arith.constant 0 : index
    %4 = memref.load %arg2[%c0_2] : memref<1xf32, #tpu.memory_space<smem>>
    %5 = vector.broadcast %4 : f32 to vector<1x2048xf32>
    %6 = arith.addf %3, %5 : vector<1x2048xf32>
    %c0_3 = arith.constant 0 : index
    %c0_4 = arith.constant 0 : index
    %7 = vector.load %arg4[%c0_3, %c0_4] : memref<1x2048xf32, #tpu.memory_space<vmem>>, vector<1x2048xf32>
    tpu.vector_store %arg4[%c0_3, %c0_4], %6 {strides = array<i32>} : memref<1x2048xf32, #tpu.memory_space<vmem>>, vector<1x2048xf32>,
    return
  }
  func.func @transform_0(%arg0: i32) -> i32 {
    %c0_i32 = arith.constant 0 : i32
    %c0_i32_0 = arith.constant 0 : i32
    return %c0_i32 : i32
  }
  func.func @transform_1(%arg0: i32) -> i32 {
    %c0_i32 = arith.constant 0 : i32
    %c0_i32_0 = arith.constant 0 : i32
    return %c0_i32 : i32
  }
  func.func @transform_2(%arg0: i32) -> (i32, i32) {
    %c0_i32 = arith.constant 0 : i32
    %c0_i32_0 = arith.constant 0 : i32
    return %arg0, %c0_i32 : i32, i32
  }
  func.func @transform_3(%arg0: i32) -> (i32, i32) {
    %c0_i32 = arith.constant 0 : i32
    %c0_i32_0 = arith.constant 0 : i32
    return %arg0, %c0_i32 : i32, i32
  }
}

</mosaic_0001>

<llo_original>
// kernel: _scalar_scale_bias_impl.1
$region0: #{_scalar_scale_bias_impl.1}
  #allocation0 [shape = 'u32[]', space=smem, size = 0x4, offset = 0x4, fixed_abs, tag = 'smem constant byte address 0x4 - core index']
  #allocation1 [shape = 'u32[144,128]{1,0:T(1,128)}', space=vmem, size = 0x12000, scoped, tag = 'internal scratch']
  #allocation2 [shape = 'f32[1]{0:T(128)S(6)}', space=smem, size = 0x200, scoped, tag = 'scoped memory for _scalar_scale_bias_impl.1']
  #allocation3 [shape = 'f32[1]{0:T(128)S(6)}', space=smem, size = 0x200, scoped, tag = 'scoped memory for _scalar_scale_bias_impl.1']
  %s0 = inlined_call_operand.<no memory space> [shape: f32[1], index: 0, kind: input, shape index: {}]
  %s1 = inlined_call_operand.<no memory space> [shape: f32[1], index: 1, kind: input, shape index: {}]
  %s2 = inlined_call_operand.vmem [shape: f32[1,2048], index: 2, kind: input, shape index: {}]
  %s3 = inlined_call_operand.vmem [shape: f32[1,2048], index: 3, kind: output, shape index: {}]
  %s4 = sld [smem:[#allocation0]]
  $region22: #{_scalar_scale_bias_impl.1} parent=0
    _
  %s6 = ssub.s32 1, %s4
  %s7 = scalar_select 0, %s6, %s4
  %8 = sst [smem:[#allocation2]] %s0
  %9 = sst [smem:[#allocation3]] %s1
  // Predicated region
  $region2: #{_scalar_scale_bias_impl.1} parent=0 // pred_check
    _
  $region3: #{_scalar_scale_bias_impl.1} parent=0 // pred_check_branch
    %11 = sbr.rel (0) target = $region5
  $region4: #{_scalar_scale_bias_impl.1} parent=0 // pred_region
    _
  $region5: #{_scalar_scale_bias_impl.1} parent=0 // pred_fallthru
    _
  // Predicated region
  $region6: #{_scalar_scale_bias_impl.1} parent=0 // pred_check
    _
  $region7: #{_scalar_scale_bias_impl.1} parent=0 // pred_check_branch
    %13 = sbr.rel (0) target = $region9
  $region8: #{_scalar_scale_bias_impl.1} parent=0 // pred_region
    _
  $region9: #{_scalar_scale_bias_impl.1} parent=0 // pred_fallthru
    _
  // Predicated region
  $region10: #{_scalar_scale_bias_impl.1} parent=0 // pred_check
    _
  $region11: #{_scalar_scale_bias_impl.1} parent=0 // pred_check_branch
    %15 = sbr.rel (0) target = $region13
  $region12: #{_scalar_scale_bias_impl.1} parent=0 // pred_region
    _
  $region13: #{_scalar_scale_bias_impl.1} parent=0 // pred_fallthru
    _
  %v16 = vld [vmem:[%s2] sm:$0xff]
  %v17 = vld [vmem:[%s2 + $0x8] sm:$0xff]
  %s18 = sld [smem:[#allocation2]]
  %v19 = vstv %s18
  %v20 = vmul.f32 %v16, %v19
  %v21 = vmul.f32 %v17, %v19
  %s22 = sld [smem:[#allocation3]]
  %v23 = vstv %s22
  %v24 = vadd.f32 %v20, %v23
  %v25 = vadd.f32 %v21, %v23
  %26 = vst [vmem:[%s3] sm:$0xff] %v24
  %27 = vst [vmem:[%s3 + $0x8] sm:$0xff] %v25
  // Predicated region
  $region14: #{_scalar_scale_bias_impl.1} parent=0 // pred_check
    _
  $region15: #{_scalar_scale_bias_impl.1} parent=0 // pred_check_branch
    %29 = sbr.rel (0) target = $region17
  $region16: #{_scalar_scale_bias_impl.1} parent=0 // pred_region
    _
  $region17: #{_scalar_scale_bias_impl.1} parent=0 // pred_fallthru
    _
  // Predicated region
  $region18: #{_scalar_scale_bias_impl.1} parent=0 // pred_check
    _
  $region19: #{_scalar_scale_bias_impl.1} parent=0 // pred_check_branch
    %31 = sbr.rel (0) target = $region21
  $region20: #{_scalar_scale_bias_impl.1} parent=0 // pred_region
    _
  $region21: #{_scalar_scale_bias_impl.1} parent=0 // pred_fallthru
    _

</llo_original>
